<compile_context>
chip_gen: v5e
topology: v5e:2x2
jax: 0.10.0
libtpu: 0.0.40
codegen_flags: <defaults>
</compile_context>

<pallas_src>
import jax
import jax.numpy as jnp
from jax.experimental import pallas as pl
from jax.experimental.pallas import tpu as pltpu

SMOKE_LAYERS = 10
ENV_LAYERS = 30
MAX_VAL = 5.0

_LANE = 128
_FEATURE_BLOCK_BUDGET = 4 << 20   # bytes per streamed feature block
_VMEM_LIMIT_BYTES = 40 << 20      # explicit scoped-VMEM limit (fits v7x 64 MiB)


def _round_up(x, m):
    return (x + m - 1) // m * m


# ----------------------------- Pallas kernel --------------------------------
def _loss_partials_kernel(fi_ref, ff_ref, fb_ref, alpha_ref, out_ref, acc_ref):
    """Per-(batch, hw-split) partial sums, accumulated in VMEM scratch.

    acc_ref (VMEM f32[C, 3]) accumulates across the innermost ("arbitrary")
    HW grid axis; out_ref is written once at the last HW step.
      [:, 0] sum_over_HW(F_I * mask)                        (per channel)
      [:, 1] sum_over_HW(F_B * mask)                        (per channel)
      [:, 2] sum_over_HW((F_I - (F_F + F_B*(1-alpha)))**2)  (per channel)
    """
    h = pl.program_id(2)

    @pl.when(h == 0)
    def _():
        acc_ref[...] = jnp.zeros_like(acc_ref)

    fi = fi_ref[...].astype(jnp.float32)         # (C, T)
    ff = ff_ref[...].astype(jnp.float32)         # (C, T)
    fb = fb_ref[...].astype(jnp.float32)         # (C, T)
    alpha = alpha_ref[...].astype(jnp.float32)   # (1, T)

    # Hoisted (1,T)->(C,T) broadcasts (JAX does not CSE broadcast_in_dim).
    mask_b = jnp.broadcast_to(
        jnp.where(alpha < 0.1, jnp.float32(0.0), jnp.float32(1.0)), fi.shape)
    oma_b = jnp.broadcast_to(1.0 - alpha, fi.shape)

    fim = fi * mask_b
    fbm = fb * mask_b
    resid = fi - (ff + fb * oma_b)

    acc_ref[...] += jnp.concatenate(
        [jnp.sum(fim, axis=-1, keepdims=True),
         jnp.sum(fbm, axis=-1, keepdims=True),
         jnp.sum(resid * resid, axis=-1, keepdims=True)], axis=-1)

    @pl.when(h == pl.num_programs(2) - 1)
    def _():
        out_ref[...] = acc_ref[...]


def _choose_tiling(hw, c, itemsize, p_split):
    """Pick (tile, n_hw, hw_padded): lane tile (multiple of 128), reduction
    steps per hw-split, and total padded HW.  One feature block is kept at
    <= _FEATURE_BLOCK_BUDGET bytes; the tile is rebalanced to minimize pad."""
    hw_aligned = _round_up(max(hw, 1), _LANE * p_split)
    blocks_per_split = hw_aligned // (_LANE * p_split)
    max_blocks = max(1, _FEATURE_BLOCK_BUDGET // (c * _LANE * itemsize))
    blocks_per_tile = min(max_blocks, blocks_per_split)
    n_hw = pl.cdiv(blocks_per_split, blocks_per_tile)
    blocks_per_tile = pl.cdiv(blocks_per_split, n_hw)   # rebalance -> min pad
    tile = blocks_per_tile * _LANE
    hw_padded = n_hw * tile * p_split
    return tile, n_hw, hw_padded


def _run_loss_partials(fi, ff, fb, alpha):
    """fi/ff/fb: (N, C, HW) any float dtype; alpha: (N, 1, HW) f32.

    Returns f32[N, P, C, 3] partial sums (caller sums over N and P).
    """
    N, C, HW = fi.shape
    p_split = 2 if _round_up(HW, _LANE) >= 2 * _LANE else 1
    tile, n_hw, hw_padded = _choose_tiling(
        HW, C, jnp.dtype(fi.dtype).itemsize, p_split)

    if hw_padded != HW:
        pad = ((0, 0), (0, 0), (0, hw_padded - HW))
        fi = jnp.pad(fi, pad)      # zeros -> resid == 0 in padded region
        ff = jnp.pad(ff, pad)
        fb = jnp.pad(fb, pad)
        alpha = jnp.pad(alpha, pad)  # zeros -> mask == 0 in padded region

    feat_spec = pl.BlockSpec((None, C, tile),
                             lambda b, p, h: (b, 0, p * n_hw + h))
    vec_spec = pl.BlockSpec((None, 1, tile),
                            lambda b, p, h: (b, 0, p * n_hw + h))
    out_spec = pl.BlockSpec((None, None, C, 3),
                            lambda b, p, h: (b, p, 0, 0))

    return pl.pallas_call(
        _loss_partials_kernel,
        out_shape=jax.ShapeDtypeStruct((N, p_split, C, 3), jnp.float32),
        grid_spec=pltpu.PrefetchScalarGridSpec(
            num_scalar_prefetch=0,
            grid=(N, p_split, n_hw),
            in_specs=[feat_spec, feat_spec, feat_spec, vec_spec],
            out_specs=out_spec,
            scratch_shapes=[pltpu.VMEM((C, 3), jnp.float32)],
        ),
        compiler_params=pltpu.CompilerParams(
            dimension_semantics=("parallel", "parallel", "arbitrary"),
            vmem_limit_bytes=_VMEM_LIMIT_BYTES),
    )(fi, ff, fb, alpha)


# ------------------------------ JAX glue -------------------------------------
def _bilinear_resize_align_corners(x, out_hw):
    """x: (N, 1, h, w) -> (N, 1, H, W); matches F.interpolate(mode='bilinear',
    align_corners=True)."""
    N, C, h, w = x.shape
    H, W = out_hw
    ys = (jnp.arange(H, dtype=jnp.float32) * ((h - 1) / (H - 1))
          if H > 1 else jnp.zeros((H,), jnp.float32))
    xs = (jnp.arange(W, dtype=jnp.float32) * ((w - 1) / (W - 1))
          if W > 1 else jnp.zeros((W,), jnp.float32))
    y0 = jnp.floor(ys).astype(jnp.int32)
    x0 = jnp.floor(xs).astype(jnp.int32)
    y1 = jnp.minimum(y0 + 1, h - 1)
    x1 = jnp.minimum(x0 + 1, w - 1)
    wy = (ys - y0.astype(jnp.float32))[None, None, :, None]
    wx = (xs - x0.astype(jnp.float32))[None, None, None, :]

    g = lambda yi, xi: x[:, :, yi, :][:, :, :, xi]
    top = g(y0, x0) * (1.0 - wx) + g(y0, x1) * wx
    bot = g(y1, x0) * (1.0 - wx) + g(y1, x1) * wx
    return top * (1.0 - wy) + bot * wy


def specify_layers_loss(F_I, F_F, F_B, alpha):
    """Forward of SpecifyLayersLoss_bak.  Features NCHW (f32 or bf16);
    alpha is (N,1,h,w).  Returns (orthogonal_loss, compose_loss)."""
    N, C, H, W = F_I.shape
    HW = H * W

    alpha_r = _bilinear_resize_align_corners(alpha.astype(jnp.float32), (H, W))

    # Mask sum from alpha_r in plain JAX (~HW*4 bytes; ~1% of feature traffic),
    # keeping the kernel to three per-channel lane reductions.
    mask_sum = jnp.sum(
        jnp.where(alpha_r < 0.1, 0.0, 1.0).astype(jnp.float32))

    fi = F_I.reshape(N, C, HW)
    ff = F_F.reshape(N, C, HW)
    fb = F_B.reshape(N, C, HW)
    a = alpha_r.reshape(N, 1, HW)

    partials = _run_loss_partials(fi, ff, fb, a)     # (N, P, C, 3) f32
    partials = jnp.sum(partials, axis=(0, 1))        # (C, 3)

    s_i = partials[:, 0]                             # sum(F_I*mask) per chan
    s_b = partials[:, 1]                             # sum(F_B*mask) per chan
    resid_sq = jnp.sum(partials[:, 2])

    has_mask = mask_sum > 0
    safe = jnp.where(has_mask, mask_sum, 1.0)

    smoke_in_smoke = jnp.where(
        has_mask,
        jax.nn.relu(MAX_VAL - jnp.sum(s_i[:SMOKE_LAYERS]) / safe), 0.0)
    env_in_smoke = jnp.where(
        has_mask, jnp.sum(s_b[:SMOKE_LAYERS]) / safe, 0.0)
    smoke_in_env = jnp.where(
        has_mask, jnp.sum(s_i[SMOKE_LAYERS:ENV_LAYERS]) / safe, 0.0)
    env_in_env = jnp.where(
        has_mask,
        jax.nn.relu(MAX_VAL - jnp.sum(s_b[SMOKE_LAYERS:ENV_LAYERS]) / safe),
        0.0)

    orthogonal_loss = smoke_in_smoke + env_in_smoke + smoke_in_env + env_in_env
    compose_loss = resid_sq / jnp.float32(N * C * H * W)
    return orthogonal_loss, compose_loss


# Pure-JAX reference (f32) for verification.
def _reference(F_I, F_F, F_B, alpha):
    alpha_r = _bilinear_resize_align_corners(alpha, F_I.shape[-2:])
    mask = jnp.where(alpha_r < 0.1, 0.0, 1.0)
    ms = jnp.sum(mask)
    has = ms > 0
    safe = jnp.where(has, ms, 1.0)
    s1 = jnp.sum(F_I[:, :SMOKE_LAYERS] * mask) / safe
    s2 = jnp.sum(F_B[:, :SMOKE_LAYERS] * mask) / safe
    s3 = jnp.sum(F_I[:, SMOKE_LAYERS:ENV_LAYERS] * mask) / safe
    s4 = jnp.sum(F_B[:, SMOKE_LAYERS:ENV_LAYERS] * mask) / safe
    ortho = jnp.where(
        has,
        jax.nn.relu(MAX_VAL - s1) + s2 + s3 + jax.nn.relu(MAX_VAL - s4),
        0.0)
    compose = jnp.mean((F_I - (F_F + F_B * (1.0 - alpha_r))) ** 2)
    return ortho, compose


if __name__ == "__main__":
    key = jax.random.PRNGKey(0)

    def run_case(shape, alpha_hw, feat_dtype, rtol, atol):
        n, c, h, w = shape
        k1, k2, k3, k4 = jax.random.split(jax.random.fold_in(key, h * w), 4)
        F_I = jax.random.normal(k1, shape, dtype=jnp.float32)
        F_F = jax.random.normal(k2, shape, dtype=jnp.float32)
        F_B = jax.random.normal(k3, shape, dtype=jnp.float32)
        alpha = jax.random.uniform(
            k4, (n, 1, alpha_hw[0], alpha_hw[1]), dtype=jnp.float32)

        fi, ff, fb = (t.astype(feat_dtype) for t in (F_I, F_F, F_B))
        ortho, compose = jax.block_until_ready(
            specify_layers_loss(fi, ff, fb, alpha))

        # Reference evaluated on the same (possibly bf16-rounded) values in f32.
        ortho_r, compose_r = _reference(
            fi.astype(jnp.float32), ff.astype(jnp.float32),
            fb.astype(jnp.float32), alpha)
        assert jnp.allclose(ortho, ortho_r, rtol=rtol, atol=atol), (
            shape, feat_dtype, ortho, ortho_r)
        assert jnp.allclose(compose, compose_r, rtol=rtol, atol=atol), (
            shape, feat_dtype, compose, compose_r)

    # Module needs >= 30 channels for the layer slices; keep shapes small.
    run_case((2, 32, 16, 16), (8, 8), jnp.float32, 1e-5, 1e-5)     # f32
    run_case((2, 32, 16, 16), (8, 8), jnp.bfloat16, 1e-3, 1e-3)    # bf16 stream
    run_case((1, 32, 19, 13), (10, 7), jnp.float32, 1e-5, 1e-5)    # odd HW, N=1

    print("KERNEL_OK")
</pallas_src>

<mosaic_0001>
module attributes {stable_mosaic.version = 11 : i64} {
  func.func @_loss_partials_kernel(%arg0: i32, %arg1: i32, %arg2: i32, %arg3: memref<1x32x128xf32, #tpu.memory_space<vmem>>, %arg4: memref<1x32x128xf32, #tpu.memory_space<vmem>>, %arg5: memref<1x32x128xf32, #tpu.memory_space<vmem>>, %arg6: memref<1x1x128xf32, #tpu.memory_space<vmem>>, %arg7: memref<1x1x32x3xf32, #tpu.memory_space<vmem>>, %arg8: memref<32x3xf32, #tpu.memory_space<vmem>>) attributes {dimension_semantics = [#tpu.dimension_semantics<parallel>, #tpu.dimension_semantics<parallel>, #tpu.dimension_semantics<arbitrary>], iteration_bounds = array<i64: 2, 2, 1>, scalar_prefetch = 0 : i64, scratch_operands = 1 : i64, tpu.core_type = #tpu.core_type<tc>, window_params = [{transform_indices = @transform_0, window_bounds = array<i64: 1, 32, 128>}, {transform_indices = @transform_1, window_bounds = array<i64: 1, 32, 128>}, {transform_indices = @transform_2, window_bounds = array<i64: 1, 32, 128>}, {transform_indices = @transform_3, window_bounds = array<i64: 1, 1, 128>}, {transform_indices = @transform_4, window_bounds = array<i64: 1, 1, 32, 3>}]} {
    %c0_i32 = arith.constant 0 : i32
    %0 = arith.cmpi eq, %arg2, %c0_i32 : i32
    %1 = arith.extui %0 : i1 to i32
    %c0_i32_0 = arith.constant 0 : i32
    %2 = arith.cmpi ne, %1, %c0_i32_0 : i32
    scf.if %2 {
      %cst_24 = arith.constant 0.000000e+00 : f32
      %41 = vector.broadcast %cst_24 : f32 to vector<32x3xf32>
      %c0_25 = arith.constant 0 : index
      %c0_26 = arith.constant 0 : index
      %42 = vector.load %arg8[%c0_25, %c0_26] : memref<32x3xf32, #tpu.memory_space<vmem>>, vector<32x3xf32>
      tpu.vector_store %arg8[%c0_25, %c0_26], %41 {strides = array<i32>} : memref<32x3xf32, #tpu.memory_space<vmem>>, vector<32x3xf32>,
    } else {
    }
    %c0 = arith.constant 0 : index
    %c0_1 = arith.constant 0 : index
    %c0_2 = arith.constant 0 : index
    %3 = vector.load %arg3[%c0, %c0_1, %c0_2] : memref<1x32x128xf32, #tpu.memory_space<vmem>>, vector<1x32x128xf32>
    %4 = vector.shape_cast %3 : vector<1x32x128xf32> to vector<32x128xf32>
    %c0_3 = arith.constant 0 : index
    %c0_4 = arith.constant 0 : index
    %c0_5 = arith.constant 0 : index
    %5 = vector.load %arg4[%c0_3, %c0_4, %c0_5] : memref<1x32x128xf32, #tpu.memory_space<vmem>>, vector<1x32x128xf32>
    %6 = vector.shape_cast %5 : vector<1x32x128xf32> to vector<32x128xf32>
    %c0_6 = arith.constant 0 : index
    %c0_7 = arith.constant 0 : index
    %c0_8 = arith.constant 0 : index
    %7 = vector.load %arg5[%c0_6, %c0_7, %c0_8] : memref<1x32x128xf32, #tpu.memory_space<vmem>>, vector<1x32x128xf32>
    %8 = vector.shape_cast %7 : vector<1x32x128xf32> to vector<32x128xf32>
    %c0_9 = arith.constant 0 : index
    %c0_10 = arith.constant 0 : index
    %c0_11 = arith.constant 0 : index
    %9 = vector.load %arg6[%c0_9, %c0_10, %c0_11] : memref<1x1x128xf32, #tpu.memory_space<vmem>>, vector<1x1x128xf32>
    %10 = vector.shape_cast %9 : vector<1x1x128xf32> to vector<1x128xf32>
    %cst = arith.constant 1.000000e-01 : f32
    %11 = vector.broadcast %cst : f32 to vector<1x128xf32>
    %12 = arith.cmpf olt, %10, %11 : vector<1x128xf32>
    %cst_12 = arith.constant 0.000000e+00 : f32
    %cst_13 = arith.constant 1.000000e+00 : f32
    %13 = vector.broadcast %cst_12 : f32 to vector<1x128xf32>
    %14 = vector.broadcast %cst_13 : f32 to vector<1x128xf32>
    %15 = arith.select %12, %13, %14 : vector<1x128xi1>, vector<1x128xf32>
    %16 = vector.shape_cast %15 : vector<1x128xf32> to vector<1x128xf32>
    %17 = vector.broadcast %16 : vector<1x128xf32> to vector<32x128xf32>
    %cst_14 = arith.constant 1.000000e+00 : f32
    %18 = vector.broadcast %cst_14 : f32 to vector<1x128xf32>
    %19 = arith.subf %18, %10 : vector<1x128xf32>
    %20 = vector.shape_cast %19 : vector<1x128xf32> to vector<1x128xf32>
    %21 = vector.broadcast %20 : vector<1x128xf32> to vector<32x128xf32>
    %22 = arith.mulf %4, %17 : vector<32x128xf32>
    %23 = arith.mulf %8, %17 : vector<32x128xf32>
    %24 = arith.mulf %8, %21 : vector<32x128xf32>
    %25 = arith.addf %6, %24 : vector<32x128xf32>
    %26 = arith.subf %4, %25 : vector<32x128xf32>
    %c0_15 = arith.constant 0 : index
    %c0_16 = arith.constant 0 : index
    %27 = vector.load %arg8[%c0_15, %c0_16] : memref<32x3xf32, #tpu.memory_space<vmem>>, vector<32x3xf32>
    %cst_17 = arith.constant dense<0.000000e+00> : vector<32xf32>
    %28 = vector.multi_reduction <add>, %22, %cst_17 [1] : vector<32x128xf32> to vector<32xf32>
    %29 = vector.shape_cast %28 : vector<32xf32> to vector<32x1xf32>
    %cst_18 = arith.constant dense<0.000000e+00> : vector<32xf32>
    %30 = vector.multi_reduction <add>, %23, %cst_18 [1] : vector<32x128xf32> to vector<32xf32>
    %31 = vector.shape_cast %30 : vector<32xf32> to vector<32x1xf32>
    %32 = arith.mulf %26, %26 : vector<32x128xf32>
    %cst_19 = arith.constant dense<0.000000e+00> : vector<32xf32>
    %33 = vector.multi_reduction <add>, %32, %cst_19 [1] : vector<32x128xf32> to vector<32xf32>
    %34 = vector.shape_cast %33 : vector<32xf32> to vector<32x1xf32>
    %35 = tpu.concatenate %29, %31, %34 in 1 : vector<32x1xf32>, vector<32x1xf32>, vector<32x1xf32> -> vector<32x3xf32>
    %36 = arith.addf %27, %35 : vector<32x3xf32>
    %c0_20 = arith.constant 0 : index
    %c0_21 = arith.constant 0 : index
    %37 = vector.load %arg8[%c0_20, %c0_21] : memref<32x3xf32, #tpu.memory_space<vmem>>, vector<32x3xf32>
    tpu.vector_store %arg8[%c0_20, %c0_21], %36 {strides = array<i32>} : memref<32x3xf32, #tpu.memory_space<vmem>>, vector<32x3xf32>,
    %c0_i32_22 = arith.constant 0 : i32
    %38 = arith.cmpi eq, %arg2, %c0_i32_22 : i32
    %39 = arith.extui %38 : i1 to i32
    %c0_i32_23 = arith.constant 0 : i32
    %40 = arith.cmpi ne, %39, %c0_i32_23 : i32
    scf.if %40 {
      %c0_24 = arith.constant 0 : index
      %c0_25 = arith.constant 0 : index
      %41 = vector.load %arg8[%c0_24, %c0_25] : memref<32x3xf32, #tpu.memory_space<vmem>>, vector<32x3xf32>
      %c0_26 = arith.constant 0 : index
      %c0_27 = arith.constant 0 : index
      %c0_28 = arith.constant 0 : index
      %c0_29 = arith.constant 0 : index
      %42 = vector.load %arg7[%c0_26, %c0_27, %c0_28, %c0_29] : memref<1x1x32x3xf32, #tpu.memory_space<vmem>>, vector<1x1x32x3xf32>
      %43 = vector.shape_cast %42 : vector<1x1x32x3xf32> to vector<32x3xf32>
      %44 = vector.shape_cast %41 : vector<32x3xf32> to vector<1x1x32x3xf32>
      tpu.vector_store %arg7[%c0_26, %c0_27, %c0_28, %c0_29], %44 {strides = array<i32>} : memref<1x1x32x3xf32, #tpu.memory_space<vmem>>, vector<1x1x32x3xf32>,
    } else {
    }
    return
  }
  func.func @transform_0(%arg0: i32, %arg1: i32, %arg2: i32) -> (i32, i32, i32) {
    %c1_i32 = arith.constant 1 : i32
    %0 = arith.muli %arg1, %c1_i32 : i32
    %1 = arith.addi %0, %arg2 : i32
    %c0_i32 = arith.constant 0 : i32
    %c0_i32_0 = arith.constant 0 : i32
    return %arg0, %c0_i32, %1 : i32, i32, i32
  }
  func.func @transform_1(%arg0: i32, %arg1: i32, %arg2: i32) -> (i32, i32, i32) {
    %c1_i32 = arith.constant 1 : i32
    %0 = arith.muli %arg1, %c1_i32 : i32
    %1 = arith.addi %0, %arg2 : i32
    %c0_i32 = arith.constant 0 : i32
    %c0_i32_0 = arith.constant 0 : i32
    return %arg0, %c0_i32, %1 : i32, i32, i32
  }
  func.func @transform_2(%arg0: i32, %arg1: i32, %arg2: i32) -> (i32, i32, i32) {
    %c1_i32 = arith.constant 1 : i32
    %0 = arith.muli %arg1, %c1_i32 : i32
    %1 = arith.addi %0, %arg2 : i32
    %c0_i32 = arith.constant 0 : i32
    %c0_i32_0 = arith.constant 0 : i32
    return %arg0, %c0_i32, %1 : i32, i32, i32
  }
  func.func @transform_3(%arg0: i32, %arg1: i32, %arg2: i32) -> (i32, i32, i32) {
    %c1_i32 = arith.constant 1 : i32
    %0 = arith.muli %arg1, %c1_i32 : i32
    %1 = arith.addi %0, %arg2 : i32
    %c0_i32 = arith.constant 0 : i32
    %c0_i32_0 = arith.constant 0 : i32
    return %arg0, %c0_i32, %1 : i32, i32, i32
  }
  func.func @transform_4(%arg0: i32, %arg1: i32, %arg2: i32) -> (i32, i32, i32, i32) {
    %c0_i32 = arith.constant 0 : i32
    %c0_i32_0 = arith.constant 0 : i32
    %c0_i32_1 = arith.constant 0 : i32
    return %arg0, %arg1, %c0_i32, %c0_i32_0 : i32, i32, i32, i32
  }
}

</mosaic_0001>

<llo_original>
// kernel: tpu_custom_call.1
$region0: #{tpu_custom_call.1}
  #allocation0 [shape = 'u32[]', space=smem, size = 0x4, offset = 0x4, fixed_abs, tag = 'smem constant byte address 0x4 - core index']
  #allocation1 [shape = 'u32[72,128]{1,0:T(1,128)}', space=vmem, size = 0x9000, scoped, tag = 'internal scratch']
  #allocation2 [shape = 'f32[32,3]{1,0:T(8,128)}', space=vmem, size = 0x4000, scoped, tag = 'scratch operand']
  %s0 = inlined_call_operand.hbm [shape: f32[2,32,256], index: 0, kind: input, shape index: {}]
  %s1 = inlined_call_operand.hbm [shape: f32[2,32,256], index: 1, kind: input, shape index: {}]
  %s2 = inlined_call_operand.hbm [shape: f32[2,32,256], index: 2, kind: input, shape index: {}]
  %s3 = inlined_call_operand.hbm [shape: f32[2,1,256], index: 3, kind: input, shape index: {}]
  %s4 = inlined_call_operand.vmem [shape: f32[2,2,32,3], index: 4, kind: output, shape index: {}]
  %s5 = sld [smem:[#allocation0]]
  $region73: #{tpu_custom_call.1} parent=0
    _
  %s7 = ssub.s32 1, %s5
  %s8 = scalar_select 0, %s7, %s5
  $region1: #{tpu_custom_call.1} parent=0
    #allocation3 [shape = 'u8[32768]{0}', space=vmem, size = 0x8000, scoped, tag = 'input window, operand 0']
    #allocation4 [shape = 's32[2]{0}', space=sflag, size = 0x8, scoped, tag = 'scoped memory for tpu_custom_call.1']
    #allocation5 [shape = 'u8[32768]{0}', space=vmem, size = 0x8000, scoped, tag = 'input window, operand 1']
    #allocation6 [shape = 's32[2]{0}', space=sflag, size = 0x8, scoped, tag = 'scoped memory for tpu_custom_call.1']
    #allocation7 [shape = 'u8[32768]{0}', space=vmem, size = 0x8000, scoped, tag = 'input window, operand 2']
    #allocation8 [shape = 'u8[1024]{0}', space=vmem, size = 0x400, scoped, tag = 'input window, operand 3']
    #allocation9 [shape = 's32[2]{0}', space=sflag, size = 0x8, scoped, tag = 'scoped memory for tpu_custom_call.1']
    %9 = vsyncpa [#allocation4], 0
    %s10 = scalar_lea.sflag [#allocation4], 1
    %11 = vsyncpa %s10, 0
    %12 = vsyncpa [#allocation6], 0
    %s13 = scalar_lea.sflag [#allocation6], 1
    %14 = vsyncpa %s13, 0
    %15 = vsyncpa [#allocation9], 0
    %s16 = scalar_lea.sflag [#allocation9], 1
    %17 = vsyncpa %s16, 0
    loop: start=0, step=1, limit=6
    $region2: #{tpu_custom_call.1} parent=1 // loop_pre_header
      _
    $region3: #{tpu_custom_call.1} parent=1 // loop_header
      %s19 = sphi 0, %s23
      %p20 = scmp.ge.s32.totalorder %s19, 6
      %s26 = sphi 0, %s45
      %s27 = sphi 0, %s41
      %s28 = sphi 0, %s37
      %s29 = sphi 0, %s26
      %s30 = sphi 0, %s27
      %s31 = sphi 0, %s28
      %s32 = sphi 0, %s29
      %s33 = sphi 0, %s30
      %s34 = sphi 0, %s31
      %s52 = sphi 0, %s54
      %s55 = sphi 0, %s52
      %s56 = sphi 0, %s55
      %s72 = sphi 0, %s56
      %s82 = sphi 0, %s84
      %s85 = sphi 0, %s82
      %s86 = sphi 0, %s85
      %s102 = sphi 0, %s86
      %s112 = sphi 0, %s114
      %s115 = sphi 0, %s112
      %s116 = sphi 0, %s115
      %s132 = sphi 0, %s116
      %s142 = sphi 0, %s144
      %s145 = sphi 0, %s142
      %s146 = sphi 0, %s145
      %s162 = sphi 0, %s146
      %s170 = sphi 0, %s172
      %s173 = sphi 0, %s170
      %s174 = sphi 0, %s173
      %s190 = sphi 0, %s174
    $region4: #{tpu_custom_call.1} parent=1 // loop_header_branch
      %22 = sbr.rel (%p20) target = $region8
    $region5: #{tpu_custom_call.1} parent=1 // loop_body
      %s24 = ssub.s32 %s19, 1
      %s25 = ssub.s32 %s19, 2
      %s35 = sadd.s32 1, %s28
      %p36 = scmp.ge.s32.totalorder %s35, 1
      %s37 = scalar_select %p36, 0, %s35
      %s38 = sadd.s32 1, %s27
      %s39 = scalar_select %p36, %s38, %s27
      %p40 = scmp.ge.s32.totalorder %s39, 2
      %s41 = scalar_select %p40, 0, %s39
      %s42 = sadd.s32 1, %s26
      %s43 = scalar_select %p40, %s42, %s26
      %p44 = scmp.ge.s32.totalorder %s43, 2
      %s45 = scalar_select %p44, 0, %s43
      %s46 = sadd.s32 %s27, %s28
      %s47 = sadd.s32 %s41, %s37
      %s48 = ssub.s32 %s26, %s45
      %s49 = ssub.s32 %s46, %s47
      %s50 = sor.u32 %s48, %s49
      %p51 = scmp.eq.s32.totalorder %s50, 0
      %s53 = sadd.s32 %s52, 1
      %s54 = scalar_select %p51, %s52, %s53
      %p57 = pneg %p51
      %p58 = scmp.eq.s32.totalorder %s19, 3
      %p59 = por %p57, %p58
      %p60 = scmp.ne.s32.totalorder %s52, %s55
      %p61 = scmp.eq.s32.totalorder %s19, 0
      %p62 = por %p60, %p61
      %p63 = scmp.ne.s32.totalorder %s52, %s55
      %p64 = scmp.eq.s32.totalorder %s24, 3
      %p65 = por %p63, %p64
      %p66 = scmp.ne.s32.totalorder %s55, %s56
      %p67 = scmp.eq.s32.totalorder %s24, 0
      %p68 = por %p66, %p67
      %p69 = scmp.ne.s32.totalorder %s55, %s56
      %p70 = scmp.eq.s32.totalorder %s25, 3
      %p71 = por %p69, %p70
      %p73 = scmp.ne.s32.totalorder %s56, %s72
      %p74 = scmp.eq.s32.totalorder %s25, 0
      %p75 = por %p73, %p74
      %s76 = sadd.s32 %s27, %s28
      %s77 = sadd.s32 %s41, %s37
      %s78 = ssub.s32 %s26, %s45
      %s79 = ssub.s32 %s76, %s77
      %s80 = sor.u32 %s78, %s79
      %p81 = scmp.eq.s32.totalorder %s80, 0
      %s83 = sadd.s32 %s82, 1
      %s84 = scalar_select %p81, %s82, %s83
      %p87 = pneg %p81
      %p88 = scmp.eq.s32.totalorder %s19, 3
      %p89 = por %p87, %p88
      %p90 = scmp.ne.s32.totalorder %s82, %s85
      %p91 = scmp.eq.s32.totalorder %s19, 0
      %p92 = por %p90, %p91
      %p93 = scmp.ne.s32.totalorder %s82, %s85
      %p94 = scmp.eq.s32.totalorder %s24, 3
      %p95 = por %p93, %p94
      %p96 = scmp.ne.s32.totalorder %s85, %s86
      %p97 = scmp.eq.s32.totalorder %s24, 0
      %p98 = por %p96, %p97
      %p99 = scmp.ne.s32.totalorder %s85, %s86
      %p100 = scmp.eq.s32.totalorder %s25, 3
      %p101 = por %p99, %p100
      %p103 = scmp.ne.s32.totalorder %s86, %s102
      %p104 = scmp.eq.s32.totalorder %s25, 0
      %p105 = por %p103, %p104
      %s106 = sadd.s32 %s27, %s28
      %s107 = sadd.s32 %s41, %s37
      %s108 = ssub.s32 %s26, %s45
      %s109 = ssub.s32 %s106, %s107
      %s110 = sor.u32 %s108, %s109
      %p111 = scmp.eq.s32.totalorder %s110, 0
      %s113 = sadd.s32 %s112, 1
      %s114 = scalar_select %p111, %s112, %s113
      %p117 = pneg %p111
      %p118 = scmp.eq.s32.totalorder %s19, 3
      %p119 = por %p117, %p118
      %p120 = scmp.ne.s32.totalorder %s112, %s115
      %p121 = scmp.eq.s32.totalorder %s19, 0
      %p122 = por %p120, %p121
      %p123 = scmp.ne.s32.totalorder %s112, %s115
      %p124 = scmp.eq.s32.totalorder %s24, 3
      %p125 = por %p123, %p124
      %p126 = scmp.ne.s32.totalorder %s115, %s116
      %p127 = scmp.eq.s32.totalorder %s24, 0
      %p128 = por %p126, %p127
      %p129 = scmp.ne.s32.totalorder %s115, %s116
      %p130 = scmp.eq.s32.totalorder %s25, 3
      %p131 = por %p129, %p130
      %p133 = scmp.ne.s32.totalorder %s116, %s132
      %p134 = scmp.eq.s32.totalorder %s25, 0
      %p135 = por %p133, %p134
      %s136 = sadd.s32 %s27, %s28
      %s137 = sadd.s32 %s41, %s37
      %s138 = ssub.s32 %s26, %s45
      %s139 = ssub.s32 %s136, %s137
      %s140 = sor.u32 %s138, %s139
      %p141 = scmp.eq.s32.totalorder %s140, 0
      %s143 = sadd.s32 %s142, 1
      %s144 = scalar_select %p141, %s142, %s143
      %p147 = pneg %p141
      %p148 = scmp.eq.s32.totalorder %s19, 3
      %p149 = por %p147, %p148
      %p150 = scmp.ne.s32.totalorder %s142, %s145
      %p151 = scmp.eq.s32.totalorder %s19, 0
      %p152 = por %p150, %p151
      %p153 = scmp.ne.s32.totalorder %s142, %s145
      %p154 = scmp.eq.s32.totalorder %s24, 3
      %p155 = por %p153, %p154
      %p156 = scmp.ne.s32.totalorder %s145, %s146
      %p157 = scmp.eq.s32.totalorder %s24, 0
      %p158 = por %p156, %p157
      %p159 = scmp.ne.s32.totalorder %s145, %s146
      %p160 = scmp.eq.s32.totalorder %s25, 3
      %p161 = por %p159, %p160
      %p163 = scmp.ne.s32.totalorder %s146, %s162
      %p164 = scmp.eq.s32.totalorder %s25, 0
      %p165 = por %p163, %p164
      %s166 = ssub.s32 %s26, %s45
      %s167 = ssub.s32 %s27, %s41
      %s168 = sor.u32 %s166, %s167
      %p169 = scmp.eq.s32.totalorder %s168, 0
      %s171 = sadd.s32 %s170, 1
      %s172 = scalar_select %p169, %s170, %s171
      %p175 = pneg %p169
      %p176 = scmp.eq.s32.totalorder %s19, 3
      %p177 = por %p175, %p176
      %p178 = scmp.ne.s32.totalorder %s170, %s173
      %p179 = scmp.eq.s32.totalorder %s19, 0
      %p180 = por %p178, %p179
      %p181 = scmp.ne.s32.totalorder %s170, %s173
      %p182 = scmp.eq.s32.totalorder %s24, 3
      %p183 = por %p181, %p182
      %p184 = scmp.ne.s32.totalorder %s173, %s174
      %p185 = scmp.eq.s32.totalorder %s24, 0
      %p186 = por %p184, %p185
      %p187 = scmp.ne.s32.totalorder %s173, %s174
      %p188 = scmp.eq.s32.totalorder %s25, 3
      %p189 = por %p187, %p188
      %p191 = scmp.ne.s32.totalorder %s174, %s190
      %p192 = scmp.eq.s32.totalorder %s25, 0
      %p193 = por %p191, %p192
      %p194 = scmp.le.s32.totalorder 1, %s19
      %p195 = scmp.lt.s32.totalorder %s19, 5
      %p196 = pnand %p194, %p195
      %p197 = pneg %p196
      // Predicated region
      $region9: #{tpu_custom_call.1} parent=5 // pred_check
        _
      $region10: #{tpu_custom_call.1} parent=5 // pred_check_branch
        %199 = sbr.rel (%p196) target = $region12
      $region11: #{tpu_custom_call.1} parent=5 // pred_region
        %s200 = ssub.s32 %s19, 1
      $region12: #{tpu_custom_call.1} parent=5 // pred_fallthru
        _
      %p201 = scmp.lt.s32.totalorder %s19, 4
      // Predicated region
      $region13: #{tpu_custom_call.1} parent=5 // pred_check
        %p202 = pneg %p201
      $region14: #{tpu_custom_call.1} parent=5 // pred_check_branch
        %204 = sbr.rel (%p202) target = $region16
      $region15: #{tpu_custom_call.1} parent=5 // pred_region
        // Predicated region
        $region17: #{tpu_custom_call.1} parent=15 // pred_check
          %p205 = pneg %p62
        $region18: #{tpu_custom_call.1} parent=15 // pred_check_branch
          %207 = sbr.rel (%p205) target = $region20
        $region19: #{tpu_custom_call.1} parent=15 // pred_region
          %s208 = sand.u32 %s52, 1
          %s209 = scalar_lea.sflag [#allocation4], %s208
          %s210 = sand.u32 %s52, 1
          %s211 = smul.addr %s210, 32
          %s212 = scalar_lea.vmem [#allocation3], %s211
          %s213 = sadd.s32 %s27, %s28
          %215 = vsyncadd %s209, 0
          %s216 = smul.addr %s26, 8
          %s217 = sadd.s32 %s213, %s216
          %s218 = smul.addr %s217, 8
          %s219 = scalar_lea.hbm %s0, %s218
          %s220 = sshll.u32 %s219, 4
          %s221 = int_to_ptr.hbm [resolvable:$true] %s220
          %s222 = sshll.u32 %s212, 4
          %s223 = int_to_ptr.vmem [resolvable:$true] %s222
          %228 = dma.hbm_to_vmem [thread:$0]  %s221, 512, %s223, %s209, 256, 128, 8
        $region20: #{tpu_custom_call.1} parent=15 // pred_fallthru
          _
        // Predicated region
        $region21: #{tpu_custom_call.1} parent=15 // pred_check
          %p229 = pneg %p92
        $region22: #{tpu_custom_call.1} parent=15 // pred_check_branch
          %231 = sbr.rel (%p229) target = $region24
        $region23: #{tpu_custom_call.1} parent=15 // pred_region
          %s232 = sand.u32 %s19, 1
          %s233 = scalar_lea.sflag [#allocation6], %s232
          %s234 = sand.u32 %s82, 1
          %s235 = smul.addr %s234, 32
          %s236 = scalar_lea.vmem [#allocation5], %s235
          %s237 = sadd.s32 %s27, %s28
          %239 = vsyncadd %s233, 0
          %s240 = smul.addr %s26, 8
          %s241 = sadd.s32 %s237, %s240
          %s242 = smul.addr %s241, 8
          %s243 = scalar_lea.hbm %s1, %s242
          %s244 = sshll.u32 %s243, 4
          %s245 = int_to_ptr.hbm [resolvable:$true] %s244
          %s246 = sshll.u32 %s236, 4
          %s247 = int_to_ptr.vmem [resolvable:$true] %s246
          %252 = dma.hbm_to_vmem [thread:$0]  %s245, 512, %s247, %s233, 256, 128, 8
        $region24: #{tpu_custom_call.1} parent=15 // pred_fallthru
          _
        // Predicated region
        $region25: #{tpu_custom_call.1} parent=15 // pred_check
          %p253 = pneg %p122
        $region26: #{tpu_custom_call.1} parent=15 // pred_check_branch
          %255 = sbr.rel (%p253) target = $region28
        $region27: #{tpu_custom_call.1} parent=15 // pred_region
          %s256 = sand.u32 %s19, 1
          %s257 = scalar_lea.sflag [#allocation6], %s256
          %s258 = sand.u32 %s112, 1
          %s259 = smul.addr %s258, 32
          %s260 = scalar_lea.vmem [#allocation7], %s259
          %s261 = sadd.s32 %s27, %s28
          %263 = vsyncadd %s257, 0
          %s264 = smul.addr %s26, 8
          %s265 = sadd.s32 %s261, %s264
          %s266 = smul.addr %s265, 8
          %s267 = scalar_lea.hbm %s2, %s266
          %s268 = sshll.u32 %s267, 4
          %s269 = int_to_ptr.hbm [resolvable:$true] %s268
          %s270 = sshll.u32 %s260, 4
          %s271 = int_to_ptr.vmem [resolvable:$true] %s270
          %276 = dma.hbm_to_vmem [thread:$0]  %s269, 512, %s271, %s257, 256, 128, 8
        $region28: #{tpu_custom_call.1} parent=15 // pred_fallthru
          _
        // Predicated region
        $region29: #{tpu_custom_call.1} parent=15 // pred_check
          %p277 = pneg %p152
        $region30: #{tpu_custom_call.1} parent=15 // pred_check_branch
          %279 = sbr.rel (%p277) target = $region32
        $region31: #{tpu_custom_call.1} parent=15 // pred_region
          %s280 = sand.u32 %s142, 1
          %s281 = scalar_lea.sflag [#allocation9], %s280
          %s282 = sand.u32 %s142, 1
          %s283 = scalar_lea.vmem [#allocation8], %s282
          %s284 = sadd.s32 %s27, %s28
          %286 = vsyncadd %s281, 0
          %s287 = smul.addr %s26, 2
          %s288 = sadd.s32 %s284, %s287
          %s289 = scalar_lea.hbm %s3, %s288
          %s291 = sshll.u32 %s289, 4
          %s292 = int_to_ptr.hbm [resolvable:$true] %s291
          %s293 = sshll.u32 %s283, 4
          %s294 = int_to_ptr.vmem [resolvable:$true] %s293
          %296 = dma.hbm_to_vmem [thread:$0]  %s292, 16, %s294, %s281
        $region32: #{tpu_custom_call.1} parent=15 // pred_fallthru
          _
      $region16: #{tpu_custom_call.1} parent=5 // pred_fallthru
        _
      %p297 = scmp.le.s32.totalorder 1, %s19
      %p298 = scmp.lt.s32.totalorder %s19, 5
      %p299 = pnand %p297, %p298
      %p300 = pneg %p299
      // Predicated region
      $region33: #{tpu_custom_call.1} parent=5 // pred_check
        _
      $region34: #{tpu_custom_call.1} parent=5 // pred_check_branch
        %302 = sbr.rel (%p299) target = $region36
      $region35: #{tpu_custom_call.1} parent=5 // pred_region
        %s303 = ssub.s32 %s19, 1
        %s304 = sand.u32 %s55, 1
        %s305 = scalar_lea.sflag [#allocation4], %s304
        %s306 = sand.u32 %s55, 1
        %s307 = smul.addr %s306, 32
        %s308 = scalar_lea.vmem [#allocation3], %s307
        // Predicated region
        $region37: #{tpu_custom_call.1} parent=35 // pred_check
          %p309 = pneg %p68
        $region38: #{tpu_custom_call.1} parent=35 // pred_check_branch
          %311 = sbr.rel (%p309) target = $region40
        $region39: #{tpu_custom_call.1} parent=35 // pred_region
          %313 = dma.done %s305, 512
        $region40: #{tpu_custom_call.1} parent=35 // pred_fallthru
          _
        %s314 = sand.u32 %s24, 1
        %s315 = scalar_lea.sflag [#allocation6], %s314
        %s316 = sand.u32 %s85, 1
        %s317 = smul.addr %s316, 32
        %s318 = scalar_lea.vmem [#allocation5], %s317
        // Predicated region
        $region41: #{tpu_custom_call.1} parent=35 // pred_check
          %p319 = pneg %p98
        $region42: #{tpu_custom_call.1} parent=35 // pred_check_branch
          %321 = sbr.rel (%p319) target = $region44
        $region43: #{tpu_custom_call.1} parent=35 // pred_region
          %323 = dma.done %s315, 512
        $region44: #{tpu_custom_call.1} parent=35 // pred_fallthru
          _
        %s324 = sand.u32 %s24, 1
        %s325 = scalar_lea.sflag [#allocation6], %s324
        %s326 = sand.u32 %s115, 1
        %s327 = smul.addr %s326, 32
        %s328 = scalar_lea.vmem [#allocation7], %s327
        // Predicated region
        $region45: #{tpu_custom_call.1} parent=35 // pred_check
          %p329 = pneg %p128
        $region46: #{tpu_custom_call.1} parent=35 // pred_check_branch
          %331 = sbr.rel (%p329) target = $region48
        $region47: #{tpu_custom_call.1} parent=35 // pred_region
          %333 = dma.done %s325, 512
        $region48: #{tpu_custom_call.1} parent=35 // pred_fallthru
          _
        %s334 = sand.u32 %s145, 1
        %s335 = scalar_lea.sflag [#allocation9], %s334
        %s336 = sand.u32 %s145, 1
        %s337 = scalar_lea.vmem [#allocation8], %s336
        // Predicated region
        $region49: #{tpu_custom_call.1} parent=35 // pred_check
          %p338 = pneg %p158
        $region50: #{tpu_custom_call.1} parent=35 // pred_check_branch
          %340 = sbr.rel (%p338) target = $region52
        $region51: #{tpu_custom_call.1} parent=35 // pred_region
          %342 = dma.done %s335, 16
        $region52: #{tpu_custom_call.1} parent=35 // pred_fallthru
          _
        %s343 = sand.u32 %s55, 1
        %s344 = scalar_lea.sflag [#allocation4], %s343
        %s345 = sand.u32 %s55, 1
        %s346 = smul.addr %s345, 32
        %s347 = scalar_lea.vmem [#allocation3], %s346
        %p348 = pneg %p68
        %p349 = pneg %p65
        %s350 = sand.u32 %s24, 1
        %s351 = scalar_lea.sflag [#allocation6], %s350
        %s352 = sand.u32 %s85, 1
        %s353 = smul.addr %s352, 32
        %s354 = scalar_lea.vmem [#allocation5], %s353
        %p355 = pneg %p98
        %p356 = pneg %p95
        %s357 = sand.u32 %s24, 1
        %s358 = scalar_lea.sflag [#allocation6], %s357
        %s359 = sand.u32 %s115, 1
        %s360 = smul.addr %s359, 32
        %s361 = scalar_lea.vmem [#allocation7], %s360
        %p362 = pneg %p128
        %p363 = pneg %p125
        %s364 = sand.u32 %s145, 1
        %s365 = scalar_lea.sflag [#allocation9], %s364
        %s366 = sand.u32 %s145, 1
        %s367 = scalar_lea.vmem [#allocation8], %s366
        %p368 = pneg %p158
        %p369 = pneg %p155
        %p370 = pneg %p186
        %p371 = pneg %p183
        %p372 = scmp.lt.s32.totalorder %s29, 1
        %s373 = scalar_select %p372, %s29, 1
        %p374 = scmp.lt.s32.totalorder %s30, 1
        %s375 = scalar_select %p374, %s30, 1
        %s376 = smul.addr %s375, 4
        %s377 = smul.addr %s373, 8
        %s378 = sadd.s32 %s376, %s377
        %s379 = smul.addr %s378, 8
        %s380 = scalar_lea.vmem %s4, %s379
        %s381 = sadd.s32 %s30, %s31
        %s382 = sadd.s32 %s30, %s31
        %s383 = sadd.s32 %s30, %s31
        %s384 = sadd.s32 %s30, %s31
        %p385 = scmp.lt.s32.totalorder %s29, 1
        %s386 = scalar_select %p385, %s29, 1
        %p387 = scmp.lt.s32.totalorder %s30, 1
        %s388 = scalar_select %p387, %s30, 1
        %s389 = smul.addr %s388, 4
        %s390 = smul.addr %s386, 8
        %s391 = sadd.s32 %s389, %s390
        %s392 = smul.addr %s391, 8
        %s393 = scalar_lea.vmem %s4, %s392
        %p394 = scmp.eq.s32.totalorder %s31, 0
        // Predicated region
        $region53: #{tpu_custom_call.1} parent=35 // pred_check
          %p395 = pneg %p394
        $region54: #{tpu_custom_call.1} parent=35 // pred_check_branch
          %397 = sbr.rel (%p395) target = $region56
        $region55: #{tpu_custom_call.1} parent=35 // pred_region
          %vm398 = vcmask 23552
          %399 = vst.msk [vmem:[#allocation2] sm:$0xff] %vm398, 0.0
          %400 = vst.msk [vmem:[#allocation2 + $0x8] sm:$0xff] %vm398, 0.0
          %401 = vst.msk [vmem:[#allocation2 + $0x10] sm:$0xff] %vm398, 0.0
          %402 = vst.msk [vmem:[#allocation2 + $0x18] sm:$0xff] %vm398, 0.0
        $region56: #{tpu_custom_call.1} parent=35 // pred_fallthru
          _
        %v403 = vld [vmem:[%s308] sm:$0xff]
        %v404 = vld [vmem:[%s308 + $0x8] sm:$0xff]
        %v405 = vld [vmem:[%s308 + $0x10] sm:$0xff]
        %v406 = vld [vmem:[%s308 + $0x18] sm:$0xff]
        %v407 = vld [vmem:[%s318] sm:$0xff]
        %v408 = vld [vmem:[%s318 + $0x8] sm:$0xff]
        %v409 = vld [vmem:[%s318 + $0x10] sm:$0xff]
        %v410 = vld [vmem:[%s318 + $0x18] sm:$0xff]
        %v411 = vld [vmem:[%s328] sm:$0xff]
        %v412 = vld [vmem:[%s328 + $0x8] sm:$0xff]
        %v413 = vld [vmem:[%s328 + $0x10] sm:$0xff]
        %v414 = vld [vmem:[%s328 + $0x18] sm:$0xff]
        %v415 = vld [vmem:[%s337] sm:$0x1]
        %vm416 = vcmp.lt.f32.partialorder %v415, 0.1
        %v417 = vsel %vm416, 0.0, 1.0
        %v419 = vperm.slane %v417, 0
        %v421 = vsub.f32 1.0, %v415
        %v423 = vperm.slane %v421, 0
        %v425 = vmul.f32 %v403, %v419
        %v426 = vmul.f32 %v404, %v419
        %v427 = vmul.f32 %v405, %v419
        %v428 = vmul.f32 %v406, %v419
        %v429 = vmul.f32 %v411, %v419
        %v430 = vmul.f32 %v412, %v419
        %v431 = vmul.f32 %v413, %v419
        %v432 = vmul.f32 %v414, %v419
        %v433 = vmul.f32 %v411, %v423
        %v434 = vmul.f32 %v412, %v423
        %v435 = vmul.f32 %v413, %v423
        %v436 = vmul.f32 %v414, %v423
        %v437 = vadd.f32 %v407, %v433
        %v438 = vadd.f32 %v408, %v434
        %v439 = vadd.f32 %v409, %v435
        %v440 = vadd.f32 %v410, %v436
        %v441 = vsub.f32 %v403, %v437
        %v442 = vsub.f32 %v404, %v438
        %v443 = vsub.f32 %v405, %v439
        %v444 = vsub.f32 %v406, %v440
        %v445 = vld [vmem:[#allocation2] sm:$0xff]
        %v446 = vld [vmem:[#allocation2 + $0x8] sm:$0xff]
        %v447 = vld [vmem:[#allocation2 + $0x10] sm:$0xff]
        %v448 = vld [vmem:[#allocation2 + $0x18] sm:$0xff]
        %449 = vadd.xlane.f32.xlu0 %v425
        %v450 = vpop.xlane.xlu0 %449
        %451 = vadd.xlane.f32.xlu0 %v426
        %v452 = vpop.xlane.xlu0 %451
        %453 = vadd.xlane.f32.xlu0 %v427
        %v454 = vpop.xlane.xlu0 %453
        %455 = vadd.xlane.f32.xlu0 %v428
        %v456 = vpop.xlane.xlu0 %455
        %457 = vadd.xlane.f32.xlu0 %v429
        %v458 = vpop.xlane.xlu0 %457
        %459 = vadd.xlane.f32.xlu0 %v430
        %v460 = vpop.xlane.xlu0 %459
        %461 = vadd.xlane.f32.xlu0 %v431
        %v462 = vpop.xlane.xlu0 %461
        %463 = vadd.xlane.f32.xlu0 %v432
        %v464 = vpop.xlane.xlu0 %463
        %v465 = vmul.f32 %v441, %v441
        %v466 = vmul.f32 %v442, %v442
        %v467 = vmul.f32 %v443, %v443
        %v468 = vmul.f32 %v444, %v444
        %469 = vadd.xlane.f32.xlu0 %v465
        %v470 = vpop.xlane.xlu0 %469
        %471 = vadd.xlane.f32.xlu0 %v466
        %v472 = vpop.xlane.xlu0 %471
        %473 = vadd.xlane.f32.xlu0 %v467
        %v474 = vpop.xlane.xlu0 %473
        %475 = vadd.xlane.f32.xlu0 %v468
        %v476 = vpop.xlane.xlu0 %475
        %vm477 = vcmask 7168
        %v478 = vsel %vm477, %v450, %v458
        %v479 = vsel %vm477, %v452, %v460
        %v480 = vsel %vm477, %v454, %v462
        %v481 = vsel %vm477, %v456, %v464
        %vm482 = vcmask 15360
        %v483 = vsel %vm482, %v478, %v470
        %v484 = vsel %vm482, %v479, %v472
        %v485 = vsel %vm482, %v480, %v474
        %v486 = vsel %vm482, %v481, %v476
        %v487 = vadd.f32 %v445, %v483
        %v488 = vadd.f32 %v446, %v484
        %v489 = vadd.f32 %v447, %v485
        %v490 = vadd.f32 %v448, %v486
        %vm491 = vcmask 23552
        %492 = vst.msk [vmem:[#allocation2] sm:$0xff] %vm491, %v487
        %493 = vst.msk [vmem:[#allocation2 + $0x8] sm:$0xff] %vm491, %v488
        %494 = vst.msk [vmem:[#allocation2 + $0x10] sm:$0xff] %vm491, %v489
        %495 = vst.msk [vmem:[#allocation2 + $0x18] sm:$0xff] %vm491, %v490
        // Predicated region
        $region57: #{tpu_custom_call.1} parent=35 // pred_check
          %p496 = pneg %p394
        $region58: #{tpu_custom_call.1} parent=35 // pred_check_branch
          %498 = sbr.rel (%p496) target = $region60
        $region59: #{tpu_custom_call.1} parent=35 // pred_region
          %v499 = vld [vmem:[#allocation2] sm:$0xff]
          %v500 = vld [vmem:[#allocation2 + $0x8] sm:$0xff]
          %v501 = vld [vmem:[#allocation2 + $0x10] sm:$0xff]
          %v502 = vld [vmem:[#allocation2 + $0x18] sm:$0xff]
          %503 = vst.msk [vmem:[%s393] sm:$0xff] %vm491, %v499
          %504 = vst.msk [vmem:[%s393 + $0x8] sm:$0xff] %vm491, %v500
          %505 = vst.msk [vmem:[%s393 + $0x10] sm:$0xff] %vm491, %v501
          %506 = vst.msk [vmem:[%s393 + $0x18] sm:$0xff] %vm491, %v502
        $region60: #{tpu_custom_call.1} parent=35 // pred_fallthru
          _
        %p507 = scmp.lt.s32.totalorder %s29, 1
        %s508 = scalar_select %p507, %s29, 1
        %p509 = scmp.lt.s32.totalorder %s30, 1
        %s510 = scalar_select %p509, %s30, 1
        %s511 = smul.addr %s510, 4
        %s512 = smul.addr %s508, 8
        %s513 = sadd.s32 %s511, %s512
        %s514 = smul.addr %s513, 8
        %s515 = scalar_lea.vmem %s4, %s514
        // Predicated region
        $region61: #{tpu_custom_call.1} parent=35 // pred_check
          %p516 = pneg %p183
        $region62: #{tpu_custom_call.1} parent=35 // pred_check_branch
          %518 = sbr.rel (%p516) target = $region64
        $region63: #{tpu_custom_call.1} parent=35 // pred_region
          _
        $region64: #{tpu_custom_call.1} parent=35 // pred_fallthru
          _
      $region36: #{tpu_custom_call.1} parent=5 // pred_fallthru
        _
      %p519 = scmp.le.s32.totalorder 2, %s19
      // Predicated region
      $region65: #{tpu_custom_call.1} parent=5 // pred_check
        %p520 = pneg %p519
      $region66: #{tpu_custom_call.1} parent=5 // pred_check_branch
        %522 = sbr.rel (%p520) target = $region68
      $region67: #{tpu_custom_call.1} parent=5 // pred_region
        %s523 = ssub.s32 %s19, 2
        // Predicated region
        $region69: #{tpu_custom_call.1} parent=67 // pred_check
          %p524 = pneg %p189
        $region70: #{tpu_custom_call.1} parent=67 // pred_check_branch
          %526 = sbr.rel (%p524) target = $region72
        $region71: #{tpu_custom_call.1} parent=67 // pred_region
          %p527 = scmp.lt.s32.totalorder %s32, 1
          %s528 = scalar_select %p527, %s32, 1
          %p529 = scmp.lt.s32.totalorder %s33, 1
          %s530 = scalar_select %p529, %s33, 1
          %s531 = smul.addr %s530, 4
          %s532 = smul.addr %s528, 8
          %s533 = sadd.s32 %s531, %s532
          %s534 = smul.addr %s533, 8
          %s535 = scalar_lea.vmem %s4, %s534
        $region72: #{tpu_custom_call.1} parent=67 // pred_fallthru
          _
      $region68: #{tpu_custom_call.1} parent=5 // pred_fallthru
        _
    $region6: #{tpu_custom_call.1} parent=1 // loop_footer
      %s23 = sadd.s32 1, %s19
    $region7: #{tpu_custom_call.1} parent=1 // loop_footer_branch
      %18 = sbr.rel target = $region3
    $region8: #{tpu_custom_call.1} parent=1 // loop_exit
      _
    %536 = vsyncpa [#allocation4], 1
    %s537 = scalar_lea.sflag [#allocation4], 1
    %538 = vsyncpa %s537, 1
    %539 = vsyncpa [#allocation6], 1
    %s540 = scalar_lea.sflag [#allocation6], 1
    %541 = vsyncpa %s540, 1
    %542 = vsyncpa [#allocation9], 1
    %s543 = scalar_lea.sflag [#allocation9], 1
    %544 = vsyncpa %s543, 1

</llo_original>
